<compile_context>
chip_gen: v7x
topology: tpu7x:2x2x1
jax: 0.10.0
libtpu: 0.0.40
codegen_flags: <defaults>
</compile_context>

<pallas_src>
import functools

import jax
import jax.numpy as jnp
import numpy as np
from jax import lax
from jax.experimental import pallas as pl
from jax.experimental.pallas import tpu as pltpu

NEG_INIT = -1e38        # scatter_max fill value
NEG_THRESH = -10000.0   # tg.utils.scatter_('max') semantics: values below -> 0
LANE = 128


def _round_up(v, m):
    return (v + m - 1) // m * m


# --------------------------------------------------------------------------- #
# Kernel: one Fm call fused with the coupling residual add.
#   out_tile = res_tile + relu( x_tile @ W1 + mrconv_agg(y_in)_tile @ W2 + b )
# --------------------------------------------------------------------------- #
def _fm_mrconv_kernel(nbr_ref, deg_ref,                       # SMEM (scalar prefetch)
                      xin_ref, res_ref, w1_ref, w2_ref, b_ref,  # VMEM inputs
                      out_ref,                                  # VMEM output
                      agg_ref,                                  # VMEM scratch
                      *, max_deg):
    tile_n, c_pad = out_ref.shape
    i = pl.program_id(0)
    row0 = pl.multiple_of(i * tile_n, tile_n)

    # Per-row, degree-bounded gather + running max from the VMEM-resident y_in.
    # Linear in (deg * C_pad); invalid ELL slots are never touched.
    def row_body(r, carry):
        g = row0 + r
        d_r = deg_ref[g]

        def nb_body(d, acc):
            j = nbr_ref[g * max_deg + d]
            return jnp.maximum(acc, xin_ref[pl.ds(j, 1), :])

        m = lax.fori_loop(0, d_r, nb_body,
                          jnp.full((1, c_pad), NEG_INIT, dtype=jnp.float32))
        agg_ref[pl.ds(r, 1), :] = m
        return carry

    lax.fori_loop(0, tile_n, row_body, 0)

    x_dst = xin_ref[pl.ds(row0, tile_n), :]                    # [T, C_pad] f32
    # max_j (x_j - x_i) == (max_j x_j) - x_i  (rounding is monotone -> identical)
    agg = agg_ref[...] - x_dst
    agg = jnp.where(agg < NEG_THRESH, 0.0, agg)                # scatter_('max') fill

    # Two accumulating bf16 matmuls (f32 accumulation) instead of cat(...) @ W.
    h = jnp.dot(x_dst.astype(jnp.bfloat16), w1_ref[...],
                preferred_element_type=jnp.float32)
    h = h + jnp.dot(agg.astype(jnp.bfloat16), w2_ref[...],
                    preferred_element_type=jnp.float32)
    h = h + b_ref[...]
    out_ref[...] = res_ref[...] + jnp.maximum(h, 0.0)


def _mrconv_fm_call(nbr_flat, deg, y_in_p, res_p, w1_p, w2_p, b_p, *,
                    tile_n, max_deg):
    n_pad, c_pad = y_in_p.shape
    grid = (n_pad // tile_n,)

    # Linear cost model (no quadratic one-hot gather anymore).
    flops = 2 * n_pad * c_pad * c_pad * 2                       # two K=C_pad matmuls
    bytes_accessed = (4 * (y_in_p.size + res_p.size + n_pad * c_pad + b_p.size)
                      + 2 * (w1_p.size + w2_p.size)
                      + 4 * (nbr_flat.size + deg.size))

    # Explicit VMEM budget: resident y_in (double-buffered) + tiles + weights.
    vmem_needed = (2 * y_in_p.size * 4
                   + 2 * tile_n * c_pad * 4 * 2      # res tile + out tile
                   + 2 * (w1_p.size + w2_p.size) * 2  # bf16 weights
                   + 2 * b_p.size * 4
                   + tile_n * c_pad * 4)              # agg scratch
    vmem_limit = int(min(128 * 1024 * 1024, max(vmem_needed + (8 << 20), 16 << 20)))

    kernel = functools.partial(_fm_mrconv_kernel, max_deg=max_deg)

    return pl.pallas_call(
        kernel,
        out_shape=jax.ShapeDtypeStruct((n_pad, c_pad), jnp.float32),
        grid_spec=pltpu.PrefetchScalarGridSpec(
            num_scalar_prefetch=2,                    # nbr_flat, deg -> SMEM
            grid=grid,
            in_specs=[
                pl.BlockSpec((n_pad, c_pad), lambda i, nbr, deg: (0, 0)),   # y_in (resident gather source)
                pl.BlockSpec((tile_n, c_pad), lambda i, nbr, deg: (i, 0)),  # residual chunk xs[i]
                pl.BlockSpec((c_pad, c_pad), lambda i, nbr, deg: (0, 0)),   # W1 (x part)
                pl.BlockSpec((c_pad, c_pad), lambda i, nbr, deg: (0, 0)),   # W2 (agg part)
                pl.BlockSpec((1, c_pad), lambda i, nbr, deg: (0, 0)),       # b
            ],
            out_specs=pl.BlockSpec((tile_n, c_pad), lambda i, nbr, deg: (i, 0)),
            scratch_shapes=[pltpu.VMEM((tile_n, c_pad), jnp.float32)],
        ),
        compiler_params=pltpu.CompilerParams(
            dimension_semantics=("parallel",),
            vmem_limit_bytes=vmem_limit),
        cost_estimate=pl.CostEstimate(flops=int(flops), transcendentals=0,
                                      bytes_accessed=int(bytes_accessed)),
    )(nbr_flat, deg, y_in_p, res_p, w1_p, w2_p, b_p)


def _build_neighbor_table(edge_index, n_pad, max_deg):
    """dst-sorted padded-neighbour (ELL) table + per-node in-degree (jit-friendly).

    max_deg is a *static* cap chosen ahead of time; edges beyond the cap of a
    node are dropped (and the degree clamped), so no stale-slot data can leak.
    """
    src = edge_index[0].astype(jnp.int32)
    dst = edge_index[1].astype(jnp.int32)
    num_edges = src.shape[0]

    order = jnp.argsort(dst)                     # sort edges by destination
    dst_s = dst[order]
    src_s = src[order]
    seg_start = jnp.searchsorted(dst_s, dst_s, side="left").astype(jnp.int32)
    pos = jnp.arange(num_edges, dtype=jnp.int32) - seg_start     # slot within segment

    nbr = jnp.zeros((n_pad, max_deg), jnp.int32).at[dst_s, pos].set(src_s, mode="drop")
    deg = jnp.zeros((n_pad,), jnp.int32).at[dst_s].add(1)
    deg = jnp.minimum(deg, max_deg)
    return nbr.reshape(-1), deg


def group_additive_coupling(x, edge_index, weights, biases, *, group=2,
                            tile_n=128, max_deg=None):
    """GroupAdditiveCoupling.forward with MRConv-GraphConv Fms (split_dim=-1).

    tile_n: node rows per grid step (128 fills the v5e MXU; use 256 on v6e/v7x).
    max_deg: static cap on per-node in-degree; pass it explicitly to avoid a
             device->host sync per forward call.
    """
    n, c_total = x.shape
    assert c_total % group == 0
    assert tile_n % 8 == 0
    c = c_total // group
    c_pad = _round_up(c, LANE)
    n_pad = _round_up(n, tile_n)

    if max_deg is None:
        # Fallback (host sync): prefer passing a static cap from the caller.
        max_deg = int(jnp.bincount(edge_index[1].astype(jnp.int32), length=n).max())
    max_deg = max(int(max_deg), 1)

    nbr_flat, deg = _build_neighbor_table(edge_index, n_pad, max_deg)

    def pad_feat(a):
        return jnp.pad(a, ((0, n_pad - n), (0, c_pad - c))).astype(jnp.float32)

    xs_p = [pad_feat(x[:, i * c:(i + 1) * c]) for i in range(group)]

    w1s, w2s, bs = [], [], []
    for w, b in zip(weights, biases):
        w1 = jnp.pad(w[:c, :], ((0, c_pad - c), (0, c_pad - c)))   # multiplies x
        w2 = jnp.pad(w[c:, :], ((0, c_pad - c), (0, c_pad - c)))   # multiplies agg
        w1s.append(w1.astype(jnp.bfloat16))
        w2s.append(w2.astype(jnp.bfloat16))
        bs.append(jnp.pad(b, (0, c_pad - c)).reshape(1, c_pad).astype(jnp.float32))

    # Additive coupling chain.
    y_in = xs_p[1]
    for xi in xs_p[2:]:
        y_in = y_in + xi
    ys = []
    for i in range(group):
        y_pad = _mrconv_fm_call(nbr_flat, deg, y_in, xs_p[i], w1s[i], w2s[i], bs[i],
                                tile_n=tile_n, max_deg=max_deg)
        y_in = y_pad                             # padded rows never feed valid outputs
        ys.append(y_pad[:n, :c])
    return jnp.concatenate(ys, axis=1)


# ----------------------------- pure-JAX reference --------------------------- #
def _mrconv_ref(x, edge_index, w, b):
    src, dst = edge_index[0], edge_index[1]
    diff = x[src] - x[dst]
    agg = jnp.full_like(x, NEG_INIT).at[dst].max(diff)
    agg = jnp.where(agg < NEG_THRESH, 0.0, agg)
    h = jnp.concatenate([x, agg], axis=1)
    # Same numerics as the kernel: bf16 operands, f32 accumulation.
    hb = jnp.dot(h.astype(jnp.bfloat16), w.astype(jnp.bfloat16),
                 preferred_element_type=jnp.float32)
    return jax.nn.relu(hb + b)


def _ref_group_additive_coupling(x, edge_index, weights, biases, *, group=2):
    c = x.shape[1] // group
    xs = [x[:, i * c:(i + 1) * c] for i in range(group)]
    y_in = xs[1]
    for xi in xs[2:]:
        y_in = y_in + xi
    ys = []
    for i in range(group):
        fmd = _mrconv_ref(y_in, edge_index, weights[i], biases[i])
        y = xs[i] + fmd
        y_in = y
        ys.append(y)
    return jnp.concatenate(ys, axis=1)


if __name__ == "__main__":
    key = jax.random.PRNGKey(0)
    k_x, k_e, k_w0, k_w1, k_b0, k_b1 = jax.random.split(key, 6)

    N, C_TOTAL, E, GROUP = 16, 8, 32, 2          # 16 nodes, 8 channels -> 4 per group
    C = C_TOTAL // GROUP

    x = jax.random.normal(k_x, (N, C_TOTAL), dtype=jnp.float32)
    edge_index = jax.random.randint(k_e, (2, E), 0, N, dtype=jnp.int32)
    weights = [jax.random.normal(k_w0, (2 * C, C), dtype=jnp.float32) * 0.1,
               jax.random.normal(k_w1, (2 * C, C), dtype=jnp.float32) * 0.1]
    biases = [jax.random.normal(k_b0, (C,), dtype=jnp.float32) * 0.1,
              jax.random.normal(k_b1, (C,), dtype=jnp.float32) * 0.1]

    # Static neighbour cap, computed ahead of time (keeps the forward jit-friendly).
    max_deg = int(np.bincount(np.asarray(edge_index[1]), minlength=N).max())

    out = group_additive_coupling(x, edge_index, weights, biases,
                                  group=GROUP, tile_n=128, max_deg=max_deg)
    out = jax.block_until_ready(out)

    ref = _ref_group_additive_coupling(x, edge_index, weights, biases, group=GROUP)
    assert out.shape == (N, C_TOTAL)
    err = float(jnp.max(jnp.abs(out - ref)))
    # Tolerance covers bf16 operand rounding differences accumulated across the
    # two-stage coupling chain; real gather / weight bugs would be O(0.1 - 1).
    assert jnp.allclose(out, ref, atol=5e-3, rtol=5e-3), \
        f"mismatch vs reference (max abs err {err})"

    print("KERNEL_OK")
</pallas_src>

<mosaic_0001>
module attributes {stable_mosaic.version = 11 : i64} {
  func.func @_fm_mrconv_kernel(%arg0: i32, %arg1: memref<768xi32, #tpu.memory_space<smem>>, %arg2: memref<128xi32, #tpu.memory_space<smem>>, %arg3: memref<128x128xf32, #tpu.memory_space<vmem>>, %arg4: memref<128x128xf32, #tpu.memory_space<vmem>>, %arg5: memref<128x128xbf16, #tpu.memory_space<vmem>>, %arg6: memref<128x128xbf16, #tpu.memory_space<vmem>>, %arg7: memref<1x128xf32, #tpu.memory_space<vmem>>, %arg8: memref<128x128xf32, #tpu.memory_space<vmem>>, %arg9: memref<128x128xf32, #tpu.memory_space<vmem>>) attributes {dimension_semantics = [#tpu.dimension_semantics<parallel>], iteration_bounds = array<i64: 1>, scalar_prefetch = 2 : i64, scratch_operands = 1 : i64, tpu.core_type = #tpu.core_type<tc>, window_params = [{pipeline_mode = #tpu.pipeline_mode<synchronous>, transform_indices = @transform_0, window_bounds = array<i64: 128, 128>}, {transform_indices = @transform_1, window_bounds = array<i64: 128, 128>}, {pipeline_mode = #tpu.pipeline_mode<synchronous>, transform_indices = @transform_2, window_bounds = array<i64: 128, 128>}, {pipeline_mode = #tpu.pipeline_mode<synchronous>, transform_indices = @transform_3, window_bounds = array<i64: 128, 128>}, {pipeline_mode = #tpu.pipeline_mode<synchronous>, transform_indices = @transform_4, window_bounds = array<i64: 1, 128>}, {transform_indices = @transform_5, window_bounds = array<i64: 128, 128>}]} {
    %c128_i32 = arith.constant 128 : i32
    %0 = arith.muli %arg0, %c128_i32 : i32
    %1 = tpu.assume_multiple %0, 128 : i32
    %c0_i32 = arith.constant 0 : i32
    %c128_i32_0 = arith.constant 128 : i32
    %2 = arith.addi %c0_i32, %c128_i32_0 : i32
    %c1_i32 = arith.constant 1 : i32
    scf.for %arg10 = %c0_i32 to %2 step %c1_i32  : i32 {
      %26 = arith.addi %1, %arg10 : i32
      %27 = arith.index_cast %26 : i32 to index
      %28 = memref.load %arg2[%27] : memref<128xi32, #tpu.memory_space<smem>>
      %cst_18 = arith.constant -9.99999968E+37 : f32
      %29 = vector.broadcast %cst_18 : f32 to vector<1x128xf32>
      %c0_i32_19 = arith.constant 0 : i32
      %30 = arith.subi %28, %c0_i32_19 : i32
      %31 = arith.addi %c0_i32_19, %30 : i32
      %c1_i32_20 = arith.constant 1 : i32
      %32 = scf.for %arg11 = %c0_i32_19 to %31 step %c1_i32_20 iter_args(%arg12 = %29) -> (vector<1x128xf32>)  : i32 {
        %c6_i32 = arith.constant 6 : i32
        %35 = arith.muli %26, %c6_i32 : i32
        %36 = arith.addi %35, %arg11 : i32
        %37 = arith.index_cast %36 : i32 to index
        %38 = memref.load %arg1[%37] : memref<768xi32, #tpu.memory_space<smem>>
        %39 = arith.index_cast %38 : i32 to index
        %c0_22 = arith.constant 0 : index
        %40 = vector.load %arg3[%39, %c0_22] : memref<128x128xf32, #tpu.memory_space<vmem>>, vector<1x128xf32>
        %41 = arith.maximumf %arg12, %40 : vector<1x128xf32>
        scf.yield %41 : vector<1x128xf32>
      }
      %33 = arith.index_cast %arg10 : i32 to index
      %c0_21 = arith.constant 0 : index
      %34 = vector.load %arg9[%33, %c0_21] : memref<128x128xf32, #tpu.memory_space<vmem>>, vector<1x128xf32>
      tpu.vector_store %arg9[%33, %c0_21], %32 {strides = array<i32>} : memref<128x128xf32, #tpu.memory_space<vmem>>, vector<1x128xf32>,
    }
    %c128_i32_1 = arith.constant 128 : i32
    %3 = arith.index_cast %1 : i32 to index
    %c0 = arith.constant 0 : index
    %4 = vector.load %arg3[%3, %c0] : memref<128x128xf32, #tpu.memory_space<vmem>>, vector<128x128xf32>
    %c0_2 = arith.constant 0 : index
    %c0_3 = arith.constant 0 : index
    %5 = vector.load %arg9[%c0_2, %c0_3] : memref<128x128xf32, #tpu.memory_space<vmem>>, vector<128x128xf32>
    %6 = arith.subf %5, %4 : vector<128x128xf32>
    %cst = arith.constant -1.000000e+04 : f32
    %7 = vector.broadcast %cst : f32 to vector<128x128xf32>
    %8 = arith.cmpf olt, %6, %7 : vector<128x128xf32>
    %cst_4 = arith.constant 0.000000e+00 : f32
    %9 = vector.broadcast %cst_4 : f32 to vector<128x128xf32>
    %10 = arith.select %8, %9, %6 : vector<128x128xi1>, vector<128x128xf32>
    %11 = arith.truncf %4 : vector<128x128xf32> to vector<128x128xbf16>
    %c0_5 = arith.constant 0 : index
    %c0_6 = arith.constant 0 : index
    %12 = vector.load %arg5[%c0_5, %c0_6] : memref<128x128xbf16, #tpu.memory_space<vmem>>, vector<128x128xbf16>
    %cst_7 = arith.constant dense<0.000000e+00> : vector<128x128xf32>
    %13 = tpu.matmul %11, %12, %cst_7 {dimension_numbers = #tpu.dot_dimension_numbers<[1], [0], [0], [1], [0, 0, 1, 1], [], []>} : vector<128x128xbf16>, vector<128x128xbf16>, vector<128x128xf32> -> vector<128x128xf32>
    %14 = arith.truncf %10 : vector<128x128xf32> to vector<128x128xbf16>
    %c0_8 = arith.constant 0 : index
    %c0_9 = arith.constant 0 : index
    %15 = vector.load %arg6[%c0_8, %c0_9] : memref<128x128xbf16, #tpu.memory_space<vmem>>, vector<128x128xbf16>
    %cst_10 = arith.constant dense<0.000000e+00> : vector<128x128xf32>
    %16 = tpu.matmul %14, %15, %cst_10 {dimension_numbers = #tpu.dot_dimension_numbers<[1], [0], [0], [1], [0, 0, 1, 1], [], []>} : vector<128x128xbf16>, vector<128x128xbf16>, vector<128x128xf32> -> vector<128x128xf32>
    %17 = arith.addf %13, %16 : vector<128x128xf32>
    %c0_11 = arith.constant 0 : index
    %c0_12 = arith.constant 0 : index
    %18 = vector.load %arg7[%c0_11, %c0_12] : memref<1x128xf32, #tpu.memory_space<vmem>>, vector<1x128xf32>
    %19 = vector.broadcast %18 : vector<1x128xf32> to vector<128x128xf32>
    %20 = arith.addf %17, %19 : vector<128x128xf32>
    %c0_13 = arith.constant 0 : index
    %c0_14 = arith.constant 0 : index
    %21 = vector.load %arg4[%c0_13, %c0_14] : memref<128x128xf32, #tpu.memory_space<vmem>>, vector<128x128xf32>
    %cst_15 = arith.constant 0.000000e+00 : f32
    %22 = vector.broadcast %cst_15 : f32 to vector<128x128xf32>
    %23 = arith.maximumf %20, %22 : vector<128x128xf32>
    %24 = arith.addf %21, %23 : vector<128x128xf32>
    %c0_16 = arith.constant 0 : index
    %c0_17 = arith.constant 0 : index
    %25 = vector.load %arg8[%c0_16, %c0_17] : memref<128x128xf32, #tpu.memory_space<vmem>>, vector<128x128xf32>
    tpu.vector_store %arg8[%c0_16, %c0_17], %24 {strides = array<i32>} : memref<128x128xf32, #tpu.memory_space<vmem>>, vector<128x128xf32>,
    return
  }
  func.func @transform_0(%arg0: i32, %arg1: memref<768xi32, #tpu.memory_space<smem>>, %arg2: memref<128xi32, #tpu.memory_space<smem>>) -> (i32, i32) {
    %c0_i32 = arith.constant 0 : i32
    %c0_i32_0 = arith.constant 0 : i32
    %c0_i32_1 = arith.constant 0 : i32
    return %c0_i32, %c0_i32_0 : i32, i32
  }
  func.func @transform_1(%arg0: i32, %arg1: memref<768xi32, #tpu.memory_space<smem>>, %arg2: memref<128xi32, #tpu.memory_space<smem>>) -> (i32, i32) {
    %c0_i32 = arith.constant 0 : i32
    %c0_i32_0 = arith.constant 0 : i32
    return %arg0, %c0_i32 : i32, i32
  }
  func.func @transform_2(%arg0: i32, %arg1: memref<768xi32, #tpu.memory_space<smem>>, %arg2: memref<128xi32, #tpu.memory_space<smem>>) -> (i32, i32) {
    %c0_i32 = arith.constant 0 : i32
    %c0_i32_0 = arith.constant 0 : i32
    %c0_i32_1 = arith.constant 0 : i32
    return %c0_i32, %c0_i32_0 : i32, i32
  }
  func.func @transform_3(%arg0: i32, %arg1: memref<768xi32, #tpu.memory_space<smem>>, %arg2: memref<128xi32, #tpu.memory_space<smem>>) -> (i32, i32) {
    %c0_i32 = arith.constant 0 : i32
    %c0_i32_0 = arith.constant 0 : i32
    %c0_i32_1 = arith.constant 0 : i32
    return %c0_i32, %c0_i32_0 : i32, i32
  }
  func.func @transform_4(%arg0: i32, %arg1: memref<768xi32, #tpu.memory_space<smem>>, %arg2: memref<128xi32, #tpu.memory_space<smem>>) -> (i32, i32) {
    %c0_i32 = arith.constant 0 : i32
    %c0_i32_0 = arith.constant 0 : i32
    %c0_i32_1 = arith.constant 0 : i32
    return %c0_i32, %c0_i32_0 : i32, i32
  }
  func.func @transform_5(%arg0: i32, %arg1: memref<768xi32, #tpu.memory_space<smem>>, %arg2: memref<128xi32, #tpu.memory_space<smem>>) -> (i32, i32) {
    %c0_i32 = arith.constant 0 : i32
    %c0_i32_0 = arith.constant 0 : i32
    return %arg0, %c0_i32 : i32, i32
  }
}

</mosaic_0001>

<llo_original>
// kernel: tpu_custom_call.1
$region0: #{tpu_custom_call.1}
  #allocation0 [shape = 'u32[]', space=smem, size = 0x4, offset = 0x4, fixed_abs, tag = 'smem constant byte address 0x4 - core index']
  #allocation1 [shape = 'u32[144,128]{1,0:T(1,128)}', space=vmem, size = 0x12000, scoped, tag = 'internal scratch']
  #allocation2 [shape = 'f32[128,128]{1,0:T(8,128)}', space=vmem, size = 0x10000, scoped, tag = 'scratch operand']
  #allocation3 [shape = 's32[1]{0}', space=sflag, size = 0x4, scoped, tag = 'scoped memory for tpu_custom_call.1']
  #allocation4 [shape = 'u8[3072]{0}', space=smem, size = 0xc00, scoped, tag = 'prefetched SMEM operand 0']
  #allocation5 [shape = 'u8[512]{0}', space=smem, size = 0x200, scoped, tag = 'prefetched SMEM operand 1']
  %s0 = inlined_call_operand.hbm [shape: s32[768], index: 0, kind: input, shape index: {}]
  %s1 = inlined_call_operand.vmem [shape: s32[128], index: 1, kind: input, shape index: {}]
  %s2 = inlined_call_operand.hbm [shape: f32[128,128], index: 2, kind: input, shape index: {}]
  %s3 = inlined_call_operand.hbm [shape: f32[128,128], index: 3, kind: input, shape index: {}]
  %s4 = inlined_call_operand.hbm [shape: bf16[128,128], index: 4, kind: input, shape index: {}]
  %s5 = inlined_call_operand.hbm [shape: bf16[128,128], index: 5, kind: input, shape index: {}]
  %s6 = inlined_call_operand.vmem [shape: f32[1,128], index: 6, kind: input, shape index: {}]
  %s7 = inlined_call_operand.hbm [shape: f32[128,128], index: 7, kind: output, shape index: {}]
  %s8 = sld [smem:[#allocation0]]
  $region60: #{tpu_custom_call.1} parent=0
    _
  %s10 = ssub.s32 1, %s8
  %s11 = scalar_select 0, %s10, %s8
  %13 = dma.hbm_to_smem %s0, 96, [#allocation4], [#allocation3]
  %s14 = sshll.u32 %s1, 4
  %s15 = int_to_ptr.vmem [resolvable:$true] %s14
  %17 = dma.vmem_to_smem %s15, 16, [#allocation5], [#allocation3]
  %18 = dma.done [#allocation3], 112
  %19 = sfence
  $region1: #{tpu_custom_call.1} parent=0
    #allocation6 [shape = 'u8[65536]{0}', space=vmem, size = 0x10000, scoped, tag = 'input window, operand 2, single buffered']
    #allocation7 [shape = 's32[1]{0}', space=sflag, size = 0x4, scoped, tag = 'scoped memory for tpu_custom_call.1']
    #allocation8 [shape = 's32[1]{0}', space=sflag, size = 0x4, scoped, tag = 'scoped memory for tpu_custom_call.1']
    #allocation9 [shape = 'u8[65536]{0}', space=vmem, size = 0x10000, scoped, tag = 'input window, operand 3, single buffered']
    #allocation10 [shape = 's32[1]{0}', space=sflag, size = 0x4, scoped, tag = 'scoped memory for tpu_custom_call.1']
    #allocation11 [shape = 'u8[32768]{0}', space=vmem, size = 0x8000, scoped, tag = 'input window, operand 4, single buffered']
    #allocation12 [shape = 'u8[32768]{0}', space=vmem, size = 0x8000, scoped, tag = 'input window, operand 5, single buffered']
    #allocation13 [shape = 's32[1]{0}', space=sflag, size = 0x4, scoped, tag = 'scoped memory for tpu_custom_call.1']
    #allocation14 [shape = 'u8[65536]{0}', space=vmem, size = 0x10000, scoped, tag = 'output window, operand 0, single buffered']
    %20 = vsyncpa [#allocation7], 0
    %21 = vsyncpa [#allocation10], 0
    %22 = vsyncpa [#allocation13], 0
    %23 = vsyncpa [#allocation8], 0
    // Predicated region
    $region2: #{tpu_custom_call.1} parent=1 // pred_check
      _
    $region3: #{tpu_custom_call.1} parent=1 // pred_check_branch
      %25 = sbr.rel (0) target = $region5
    $region4: #{tpu_custom_call.1} parent=1 // pred_region
      %s27 = ssub.s32 2048, 2048
      %28 = vsyncadd [#allocation7], %s27
      %s29 = sshll.u32 [#allocation6], 4
      %s30 = int_to_ptr.vmem [resolvable:$true] %s29
      %35 = dma.hbm_to_vmem [thread:$0]  %s2, 2048, %s30, [#allocation7], 128, 128, 8
    $region5: #{tpu_custom_call.1} parent=1 // pred_fallthru
      _
    // Predicated region
    $region6: #{tpu_custom_call.1} parent=1 // pred_check
      _
    $region7: #{tpu_custom_call.1} parent=1 // pred_check_branch
      %37 = sbr.rel (0) target = $region9
    $region8: #{tpu_custom_call.1} parent=1 // pred_region
      %s39 = ssub.s32 2048, 2048
      %40 = vsyncadd [#allocation10], %s39
      %s41 = sshll.u32 [#allocation9], 4
      %s42 = int_to_ptr.vmem [resolvable:$true] %s41
      %47 = dma.hbm_to_vmem [thread:$0]  %s3, 2048, %s42, [#allocation10], 128, 128, 8
    $region9: #{tpu_custom_call.1} parent=1 // pred_fallthru
      _
    // Predicated region
    $region10: #{tpu_custom_call.1} parent=1 // pred_check
      _
    $region11: #{tpu_custom_call.1} parent=1 // pred_check_branch
      %49 = sbr.rel (0) target = $region13
    $region12: #{tpu_custom_call.1} parent=1 // pred_region
      %s51 = ssub.s32 1024, 1024
      %52 = vsyncadd [#allocation10], %s51
      %s53 = sshll.u32 [#allocation11], 4
      %s54 = int_to_ptr.vmem [resolvable:$true] %s53
      %59 = dma.hbm_to_vmem [thread:$0]  %s4, 1024, %s54, [#allocation10], 64, 64, 4
    $region13: #{tpu_custom_call.1} parent=1 // pred_fallthru
      _
    // Predicated region
    $region14: #{tpu_custom_call.1} parent=1 // pred_check
      _
    $region15: #{tpu_custom_call.1} parent=1 // pred_check_branch
      %61 = sbr.rel (0) target = $region17
    $region16: #{tpu_custom_call.1} parent=1 // pred_region
      %s63 = ssub.s32 1024, 1024
      %64 = vsyncadd [#allocation13], %s63
      %s65 = sshll.u32 [#allocation12], 4
      %s66 = int_to_ptr.vmem [resolvable:$true] %s65
      %71 = dma.hbm_to_vmem [thread:$0]  %s5, 1024, %s66, [#allocation13], 64, 64, 4
    $region17: #{tpu_custom_call.1} parent=1 // pred_fallthru
      _
    // Predicated region
    $region18: #{tpu_custom_call.1} parent=1 // pred_check
      _
    $region19: #{tpu_custom_call.1} parent=1 // pred_check_branch
      %73 = sbr.rel (0) target = $region21
    $region20: #{tpu_custom_call.1} parent=1 // pred_region
      _
    $region21: #{tpu_custom_call.1} parent=1 // pred_fallthru
      _
    // Predicated region
    $region22: #{tpu_custom_call.1} parent=1 // pred_check
      _
    $region23: #{tpu_custom_call.1} parent=1 // pred_check_branch
      %75 = sbr.rel (0) target = $region25
    $region24: #{tpu_custom_call.1} parent=1 // pred_region
      %76 = dma.done [#allocation7], 2048
    $region25: #{tpu_custom_call.1} parent=1 // pred_fallthru
      _
    // Predicated region
    $region26: #{tpu_custom_call.1} parent=1 // pred_check
      _
    $region27: #{tpu_custom_call.1} parent=1 // pred_check_branch
      %78 = sbr.rel (0) target = $region29
    $region28: #{tpu_custom_call.1} parent=1 // pred_region
      %79 = dma.done [#allocation10], 2048
    $region29: #{tpu_custom_call.1} parent=1 // pred_fallthru
      _
    // Predicated region
    $region30: #{tpu_custom_call.1} parent=1 // pred_check
      _
    $region31: #{tpu_custom_call.1} parent=1 // pred_check_branch
      %81 = sbr.rel (0) target = $region33
    $region32: #{tpu_custom_call.1} parent=1 // pred_region
      %82 = dma.done [#allocation10], 1024
    $region33: #{tpu_custom_call.1} parent=1 // pred_fallthru
      _
    // Predicated region
    $region34: #{tpu_custom_call.1} parent=1 // pred_check
      _
    $region35: #{tpu_custom_call.1} parent=1 // pred_check_branch
      %84 = sbr.rel (0) target = $region37
    $region36: #{tpu_custom_call.1} parent=1 // pred_region
      %85 = dma.done [#allocation13], 1024
    $region37: #{tpu_custom_call.1} parent=1 // pred_fallthru
      _
    %s87 = smul.u32 0, 128
    loop: start=0, step=1, limit=128
    $region38: #{tpu_custom_call.1} parent=1 // loop_pre_header
      _
    $region39: #{tpu_custom_call.1} parent=1 // loop_header
      %s89 = sphi 0, %s93
      %p90 = scmp.ge.s32.totalorder %s89, 128
    $region40: #{tpu_custom_call.1} parent=1 // loop_header_branch
      %92 = sbr.rel (%p90) target = $region44
    $region41: #{tpu_custom_call.1} parent=1 // loop_body
      %s94 = sadd.s32 %s87, %s89
      %s95 = sld [smem:[#allocation5 + %s94]]
      // While loop
      $region45: #{tpu_custom_call.1} parent=41 // loop_pre_header
        _
      $region46: #{tpu_custom_call.1} parent=41 // loop_header
        %s97 = sphi 0, %s99
        %p98 = scmp.ge.s32.totalorder %s97, %s95
        %v102 = vphi -1e+38, %v108
      $region47: #{tpu_custom_call.1} parent=41 // loop_header_branch
        %101 = sbr.rel (%p98) target = $region51
      $region48: #{tpu_custom_call.1} parent=41 // loop_body
        %s103 = smul.u32 %s94, 6
        %s104 = sadd.s32 %s103, %s97
        %s105 = sld [smem:[#allocation4 + %s104]]
        %s106 = scalar_lea.vmem [#allocation6], %s105
        %v107 = vld [vmem:[%s106] sm:$0x1]
        %v108 = vmax.f32 %v102, %v107
      $region49: #{tpu_custom_call.1} parent=41 // loop_footer
        %s99 = sadd.s32 %s97, 1
      $region50: #{tpu_custom_call.1} parent=41 // loop_footer_branch
        %96 = sbr.rel target = $region46
      $region51: #{tpu_custom_call.1} parent=41 // loop_exit
        _
      %s109 = scalar_lea.vmem [#allocation2], %s89
      %110 = vst [vmem:[%s109] sm:$0x1] %v102
    $region42: #{tpu_custom_call.1} parent=1 // loop_footer
      %s93 = sadd.s32 1, %s89
    $region43: #{tpu_custom_call.1} parent=1 // loop_footer_branch
      %88 = sbr.rel target = $region39
    $region44: #{tpu_custom_call.1} parent=1 // loop_exit
      _
    %s111 = scalar_lea.vmem [#allocation6], %s87
    %v112 = vld [vmem:[%s111] sm:$0xff]
    %v113 = vld [vmem:[%s111 + $0x8] sm:$0xff]
    %v114 = vld [vmem:[%s111 + $0x10] sm:$0xff]
    %v115 = vld [vmem:[%s111 + $0x18] sm:$0xff]
    %v116 = vld [vmem:[%s111 + $0x20] sm:$0xff]
    %v117 = vld [vmem:[%s111 + $0x28] sm:$0xff]
    %v118 = vld [vmem:[%s111 + $0x30] sm:$0xff]
    %v119 = vld [vmem:[%s111 + $0x38] sm:$0xff]
    %v120 = vld [vmem:[%s111 + $0x40] sm:$0xff]
    %v121 = vld [vmem:[%s111 + $0x48] sm:$0xff]
    %v122 = vld [vmem:[%s111 + $0x50] sm:$0xff]
    %v123 = vld [vmem:[%s111 + $0x58] sm:$0xff]
    %v124 = vld [vmem:[%s111 + $0x60] sm:$0xff]
    %v125 = vld [vmem:[%s111 + $0x68] sm:$0xff]
    %v126 = vld [vmem:[%s111 + $0x70] sm:$0xff]
    %v127 = vld [vmem:[%s111 + $0x78] sm:$0xff]
    %v128 = vld [vmem:[#allocation2] sm:$0xff]
    %v129 = vld [vmem:[#allocation2 + $0x8] sm:$0xff]
    %v130 = vld [vmem:[#allocation2 + $0x10] sm:$0xff]
    %v131 = vld [vmem:[#allocation2 + $0x18] sm:$0xff]
    %v132 = vld [vmem:[#allocation2 + $0x20] sm:$0xff]
    %v133 = vld [vmem:[#allocation2 + $0x28] sm:$0xff]
    %v134 = vld [vmem:[#allocation2 + $0x30] sm:$0xff]
    %v135 = vld [vmem:[#allocation2 + $0x38] sm:$0xff]
    %v136 = vld [vmem:[#allocation2 + $0x40] sm:$0xff]
    %v137 = vld [vmem:[#allocation2 + $0x48] sm:$0xff]
    %v138 = vld [vmem:[#allocation2 + $0x50] sm:$0xff]
    %v139 = vld [vmem:[#allocation2 + $0x58] sm:$0xff]
    %v140 = vld [vmem:[#allocation2 + $0x60] sm:$0xff]
    %v141 = vld [vmem:[#allocation2 + $0x68] sm:$0xff]
    %v142 = vld [vmem:[#allocation2 + $0x70] sm:$0xff]
    %v143 = vld [vmem:[#allocation2 + $0x78] sm:$0xff]
    %v144 = vsub.f32 %v128, %v112
    %v145 = vsub.f32 %v129, %v113
    %v146 = vsub.f32 %v130, %v114
    %v147 = vsub.f32 %v131, %v115
    %v148 = vsub.f32 %v132, %v116
    %v149 = vsub.f32 %v133, %v117
    %v150 = vsub.f32 %v134, %v118
    %v151 = vsub.f32 %v135, %v119
    %v152 = vsub.f32 %v136, %v120
    %v153 = vsub.f32 %v137, %v121
    %v154 = vsub.f32 %v138, %v122
    %v155 = vsub.f32 %v139, %v123
    %v156 = vsub.f32 %v140, %v124
    %v157 = vsub.f32 %v141, %v125
    %v158 = vsub.f32 %v142, %v126
    %v159 = vsub.f32 %v143, %v127
    %vm160 = vcmp.lt.f32.partialorder %v144, -10000.0
    %vm161 = vcmp.lt.f32.partialorder %v145, -10000.0
    %vm162 = vcmp.lt.f32.partialorder %v146, -10000.0
    %vm163 = vcmp.lt.f32.partialorder %v147, -10000.0
    %vm164 = vcmp.lt.f32.partialorder %v148, -10000.0
    %vm165 = vcmp.lt.f32.partialorder %v149, -10000.0
    %vm166 = vcmp.lt.f32.partialorder %v150, -10000.0
    %vm167 = vcmp.lt.f32.partialorder %v151, -10000.0
    %vm168 = vcmp.lt.f32.partialorder %v152, -10000.0
    %vm169 = vcmp.lt.f32.partialorder %v153, -10000.0
    %vm170 = vcmp.lt.f32.partialorder %v154, -10000.0
    %vm171 = vcmp.lt.f32.partialorder %v155, -10000.0
    %vm172 = vcmp.lt.f32.partialorder %v156, -10000.0
    %vm173 = vcmp.lt.f32.partialorder %v157, -10000.0
    %vm174 = vcmp.lt.f32.partialorder %v158, -10000.0
    %vm175 = vcmp.lt.f32.partialorder %v159, -10000.0
    %v176 = vsel %vm160, 0.0, %v144
    %v177 = vsel %vm161, 0.0, %v145
    %v178 = vsel %vm162, 0.0, %v146
    %v179 = vsel %vm163, 0.0, %v147
    %v180 = vsel %vm164, 0.0, %v148
    %v181 = vsel %vm165, 0.0, %v149
    %v182 = vsel %vm166, 0.0, %v150
    %v183 = vsel %vm167, 0.0, %v151
    %v184 = vsel %vm168, 0.0, %v152
    %v185 = vsel %vm169, 0.0, %v153
    %v186 = vsel %vm170, 0.0, %v154
    %v187 = vsel %vm171, 0.0, %v155
    %v188 = vsel %vm172, 0.0, %v156
    %v189 = vsel %vm173, 0.0, %v157
    %v190 = vsel %vm174, 0.0, %v158
    %v191 = vsel %vm175, 0.0, %v159
    %v192 = vpack.c.bf16 %v113, %v112
    %v193 = vpack.c.bf16 %v115, %v114
    %v194 = vpack.c.bf16 %v117, %v116
    %v195 = vpack.c.bf16 %v119, %v118
    %v196 = vpack.c.bf16 %v121, %v120
    %v197 = vpack.c.bf16 %v123, %v122
    %v198 = vpack.c.bf16 %v125, %v124
    %v199 = vpack.c.bf16 %v127, %v126
    %v200 = vld [vmem:[#allocation11] sm:$0xf]
    %v201 = vld [vmem:[#allocation11 + $0x4] sm:$0xf]
    %v202 = vld [vmem:[#allocation11 + $0x8] sm:$0xf]
    %v203 = vld [vmem:[#allocation11 + $0xc] sm:$0xf]
    %v204 = vld [vmem:[#allocation11 + $0x10] sm:$0xf]
    %v205 = vld [vmem:[#allocation11 + $0x14] sm:$0xf]
    %v206 = vld [vmem:[#allocation11 + $0x18] sm:$0xf]
    %v207 = vld [vmem:[#allocation11 + $0x1c] sm:$0xf]
    %v208 = vld [vmem:[#allocation11 + $0x20] sm:$0xf]
    %v209 = vld [vmem:[#allocation11 + $0x24] sm:$0xf]
    %v210 = vld [vmem:[#allocation11 + $0x28] sm:$0xf]
    %v211 = vld [vmem:[#allocation11 + $0x2c] sm:$0xf]
    %v212 = vld [vmem:[#allocation11 + $0x30] sm:$0xf]
    %v213 = vld [vmem:[#allocation11 + $0x34] sm:$0xf]
    %v214 = vld [vmem:[#allocation11 + $0x38] sm:$0xf]
    %v215 = vld [vmem:[#allocation11 + $0x3c] sm:$0xf]
    %v216 = vpack.c.bf16 %v177, %v176
    %v217 = vpack.c.bf16 %v179, %v178
    %v218 = vpack.c.bf16 %v181, %v180
    %v219 = vpack.c.bf16 %v183, %v182
    %v220 = vpack.c.bf16 %v185, %v184
    %v221 = vpack.c.bf16 %v187, %v186
    %v222 = vpack.c.bf16 %v189, %v188
    %v223 = vpack.c.bf16 %v191, %v190
    %v224 = vld [vmem:[#allocation12] sm:$0xf]
    %v225 = vld [vmem:[#allocation12 + $0x4] sm:$0xf]
    %v226 = vld [vmem:[#allocation12 + $0x8] sm:$0xf]
    %v227 = vld [vmem:[#allocation12 + $0xc] sm:$0xf]
    %v228 = vld [vmem:[#allocation12 + $0x10] sm:$0xf]
    %v229 = vld [vmem:[#allocation12 + $0x14] sm:$0xf]
    %v230 = vld [vmem:[#allocation12 + $0x18] sm:$0xf]
    %v231 = vld [vmem:[#allocation12 + $0x1c] sm:$0xf]
    %v232 = vld [vmem:[#allocation12 + $0x20] sm:$0xf]
    %v233 = vld [vmem:[#allocation12 + $0x24] sm:$0xf]
    %v234 = vld [vmem:[#allocation12 + $0x28] sm:$0xf]
    %v235 = vld [vmem:[#allocation12 + $0x2c] sm:$0xf]
    %v236 = vld [vmem:[#allocation12 + $0x30] sm:$0xf]
    %v237 = vld [vmem:[#allocation12 + $0x34] sm:$0xf]
    %v238 = vld [vmem:[#allocation12 + $0x38] sm:$0xf]
    %v239 = vld [vmem:[#allocation12 + $0x3c] sm:$0xf]
    %v256 = vunpack.c.l.b16 %v224
    %v257 = vunpack.c.l.b16 %v225
    %v258 = vunpack.c.l.b16 %v226
    %v259 = vunpack.c.l.b16 %v227
    %v260 = vunpack.c.l.b16 %v228
    %v261 = vunpack.c.l.b16 %v229
    %v262 = vunpack.c.l.b16 %v230
    %v263 = vunpack.c.l.b16 %v231
    %v264 = vunpack.c.l.b16 %v232
    %v265 = vunpack.c.l.b16 %v233
    %v266 = vunpack.c.l.b16 %v234
    %v267 = vunpack.c.l.b16 %v235
    %v268 = vunpack.c.l.b16 %v236
    %v269 = vunpack.c.l.b16 %v237
    %v270 = vunpack.c.l.b16 %v238
    %v271 = vunpack.c.l.b16 %v239
    %v272 = vpack.c.b16 %v257, %v256
    %v273 = vpack.c.b16 %v259, %v258
    %v274 = vpack.c.b16 %v261, %v260
    %v275 = vpack.c.b16 %v263, %v262
    %v276 = vpack.c.b16 %v265, %v264
    %v277 = vpack.c.b16 %v267, %v266
    %v278 = vpack.c.b16 %v269, %v268
    %v279 = vpack.c.b16 %v271, %v270
    %288 = vmatprep.subr.bf16.mxu0 0
    %289 = vmatpush1.bf16.msra.mxu0 %v272
    %290 = vmatprep.subr.bf16.mxu0 0
    %291 = vmatpush1.bf16.msra.mxu0 %v273
    %292 = vmatprep.subr.bf16.mxu0 0
    %293 = vmatpush1.bf16.msra.mxu0 %v274
    %294 = vmatprep.subr.bf16.mxu0 0
    %295 = vmatpush1.bf16.msra.mxu0 %v275
    %296 = vmatprep.subr.bf16.mxu0 0
    %297 = vmatpush1.bf16.msra.mxu0 %v276
    %298 = vmatprep.subr.bf16.mxu0 0
    %299 = vmatpush1.bf16.msra.mxu0 %v277
    %300 = vmatprep.subr.bf16.mxu0 0
    %301 = vmatpush1.bf16.msra.mxu0 %v278
    %302 = vmatprep.subr.bf16.mxu0 0
    %303 = vmatpush1.bf16.msra.mxu0 %v279
    %304 = vmatprep.subr.bf16.mxu0 0
    %305 = vmatpush1.bf16.msra.mxu0 0
    %306 = vmatprep.subr.bf16.mxu0 0
    %307 = vmatpush1.bf16.msra.mxu0 0
    %308 = vmatprep.subr.bf16.mxu0 0
    %309 = vmatpush1.bf16.msra.mxu0 0
    %310 = vmatprep.subr.bf16.mxu0 0
    %311 = vmatpush1.bf16.msra.mxu0 0
    %312 = vmatprep.subr.bf16.mxu0 0
    %313 = vmatpush1.bf16.msra.mxu0 0
    %314 = vmatprep.subr.bf16.mxu0 0
    %315 = vmatpush1.bf16.msra.mxu0 0
    %316 = vmatprep.subr.bf16.mxu0 0
    %317 = vmatpush1.bf16.msra.mxu0 0
    %318 = vmatprep.subr.bf16.mxu0 0
    %319 = vmatpush1.bf16.msra.mxu0 0
    %320 = vmatprep.mubr.bf16.mxu0 0
    %321 = vmatmul.mubr.bf16.gmra.mrb[0].mxu0 %v216
    %v322 = vpop.f32.mrb[0].mxu0
    %v323 = vadd.f32 0.0, %v322
    %v324 = vpop.f32.mrb[0].mxu0
    %v325 = vpop.f32.mrb[0].mxu0
    %v326 = vadd.f32 0.0, %v325
    %v327 = vpop.f32.mrb[0].mxu0
    %328 = vmatprep.mubr.bf16.mxu0 0
    %329 = vmatmul.mubr.bf16.gmra.mrb[0].mxu0 %v217
    %v330 = vpop.f32.mrb[0].mxu0
    %v331 = vadd.f32 0.0, %v330
    %v332 = vpop.f32.mrb[0].mxu0
    %v333 = vpop.f32.mrb[0].mxu0
    %v334 = vadd.f32 0.0, %v333
    %v335 = vpop.f32.mrb[0].mxu0
    %336 = vmatprep.mubr.bf16.mxu0 0
    %337 = vmatmul.mubr.bf16.gmra.mrb[0].mxu0 %v218
    %v338 = vpop.f32.mrb[0].mxu0
    %v339 = vadd.f32 0.0, %v338
    %v340 = vpop.f32.mrb[0].mxu0
    %v341 = vpop.f32.mrb[0].mxu0
    %v342 = vadd.f32 0.0, %v341
    %v343 = vpop.f32.mrb[0].mxu0
    %344 = vmatprep.mubr.bf16.mxu0 0
    %345 = vmatmul.mubr.bf16.gmra.mrb[0].mxu0 %v219
    %v346 = vpop.f32.mrb[0].mxu0
    %v347 = vadd.f32 0.0, %v346
    %v348 = vpop.f32.mrb[0].mxu0
    %v349 = vpop.f32.mrb[0].mxu0
    %v350 = vadd.f32 0.0, %v349
    %v351 = vpop.f32.mrb[0].mxu0
    %352 = vmatprep.mubr.bf16.mxu0 0
    %353 = vmatmul.mubr.bf16.gmra.mrb[0].mxu0 %v220
    %v354 = vpop.f32.mrb[0].mxu0
    %v355 = vadd.f32 0.0, %v354
    %v356 = vpop.f32.mrb[0].mxu0
    %v357 = vpop.f32.mrb[0].mxu0
    %v358 = vadd.f32 0.0, %v357
    %v359 = vpop.f32.mrb[0].mxu0
    %360 = vmatprep.mubr.bf16.mxu0 0
    %361 = vmatmul.mubr.bf16.gmra.mrb[0].mxu0 %v221
    %v362 = vpop.f32.mrb[0].mxu0
    %v363 = vadd.f32 0.0, %v362
    %v364 = vpop.f32.mrb[0].mxu0
    %v365 = vpop.f32.mrb[0].mxu0
    %v366 = vadd.f32 0.0, %v365
    %v367 = vpop.f32.mrb[0].mxu0
    %368 = vmatprep.mubr.bf16.mxu0 0
    %369 = vmatmul.mubr.bf16.gmra.mrb[0].mxu0 %v222
    %v370 = vpop.f32.mrb[0].mxu0
    %v371 = vadd.f32 0.0, %v370
    %v372 = vpop.f32.mrb[0].mxu0
    %v373 = vpop.f32.mrb[0].mxu0
    %v374 = vadd.f32 0.0, %v373
    %v375 = vpop.f32.mrb[0].mxu0
    %376 = vmatprep.mubr.bf16.mxu0 0
    %377 = vmatmul.mubr.bf16.gmra.mrb[0].mxu0 %v223
    %v378 = vpop.f32.mrb[0].mxu0
    %v379 = vadd.f32 0.0, %v378
    %v380 = vpop.f32.mrb[0].mxu0
    %v381 = vpop.f32.mrb[0].mxu0
    %v382 = vadd.f32 0.0, %v381
    %v383 = vpop.f32.mrb[0].mxu0
    %384 = vdwg.mxu0
    %v401 = vunpack.c.l.b16 %v200
    %v402 = vunpack.c.l.b16 %v201
    %v403 = vunpack.c.l.b16 %v202
    %v404 = vunpack.c.l.b16 %v203
    %v405 = vunpack.c.l.b16 %v204
    %v406 = vunpack.c.l.b16 %v205
    %v407 = vunpack.c.l.b16 %v206
    %v408 = vunpack.c.l.b16 %v207
    %v409 = vunpack.c.l.b16 %v208
    %v410 = vunpack.c.l.b16 %v209
    %v411 = vunpack.c.l.b16 %v210
    %v412 = vunpack.c.l.b16 %v211
    %v413 = vunpack.c.l.b16 %v212
    %v414 = vunpack.c.l.b16 %v213
    %v415 = vunpack.c.l.b16 %v214
    %v416 = vunpack.c.l.b16 %v215
    %v417 = vpack.c.b16 %v402, %v401
    %v418 = vpack.c.b16 %v404, %v403
    %v419 = vpack.c.b16 %v406, %v405
    %v420 = vpack.c.b16 %v408, %v407
    %v421 = vpack.c.b16 %v410, %v409
    %v422 = vpack.c.b16 %v412, %v411
    %v423 = vpack.c.b16 %v414, %v413
    %v424 = vpack.c.b16 %v416, %v415
    %433 = vmatprep.subr.bf16.mxu0 0
    %434 = vmatpush1.bf16.msra.mxu0 %v417
    %435 = vmatprep.subr.bf16.mxu0 0
    %436 = vmatpush1.bf16.msra.mxu0 %v418
    %437 = vmatprep.subr.bf16.mxu0 0
    %438 = vmatpush1.bf16.msra.mxu0 %v419
    %439 = vmatprep.subr.bf16.mxu0 0
    %440 = vmatpush1.bf16.msra.mxu0 %v420
    %441 = vmatprep.subr.bf16.mxu0 0
    %442 = vmatpush1.bf16.msra.mxu0 %v421
    %443 = vmatprep.subr.bf16.mxu0 0
    %444 = vmatpush1.bf16.msra.mxu0 %v422
    %445 = vmatprep.subr.bf16.mxu0 0
    %446 = vmatpush1.bf16.msra.mxu0 %v423
    %447 = vmatprep.subr.bf16.mxu0 0
    %448 = vmatpush1.bf16.msra.mxu0 %v424
    %449 = vmatprep.subr.bf16.mxu0 0
    %450 = vmatpush1.bf16.msra.mxu0 0
    %451 = vmatprep.subr.bf16.mxu0 0
    %452 = vmatpush1.bf16.msra.mxu0 0
    %453 = vmatprep.subr.bf16.mxu0 0
    %454 = vmatpush1.bf16.msra.mxu0 0
    %455 = vmatprep.subr.bf16.mxu0 0
    %456 = vmatpush1.bf16.msra.mxu0 0
    %457 = vmatprep.subr.bf16.mxu0 0
    %458 = vmatpush1.bf16.msra.mxu0 0
    %459 = vmatprep.subr.bf16.mxu0 0
    %460 = vmatpush1.bf16.msra.mxu0 0
    %461 = vmatprep.subr.bf16.mxu0 0
    %462 = vmatpush1.bf16.msra.mxu0 0
    %463 = vmatprep.subr.bf16.mxu0 0
    %464 = vmatpush1.bf16.msra.mxu0 0
    %465 = vmatprep.mubr.bf16.mxu0 0
    %466 = vmatmul.mubr.bf16.gmra.mrb[0].mxu0 %v192
    %v467 = vpop.f32.mrb[0].mxu0
    %v468 = vadd.f32 %v323, %v467
    %v469 = vpop.f32.mrb[0].mxu0
    %v470 = vpop.f32.mrb[0].mxu0
    %v471 = vadd.f32 %v326, %v470
    %v472 = vpop.f32.mrb[0].mxu0
    %473 = vmatprep.mubr.bf16.mxu0 0
    %474 = vmatmul.mubr.bf16.gmra.mrb[0].mxu0 %v193
    %v475 = vpop.f32.mrb[0].mxu0
    %v476 = vadd.f32 %v331, %v475
    %v477 = vpop.f32.mrb[0].mxu0
    %v478 = vpop.f32.mrb[0].mxu0
    %v479 = vadd.f32 %v334, %v478
    %v480 = vpop.f32.mrb[0].mxu0
    %481 = vmatprep.mubr.bf16.mxu0 0
    %482 = vmatmul.mubr.bf16.gmra.mrb[0].mxu0 %v194
    %v483 = vpop.f32.mrb[0].mxu0
    %v484 = vadd.f32 %v339, %v483
    %v485 = vpop.f32.mrb[0].mxu0
    %v486 = vpop.f32.mrb[0].mxu0
    %v487 = vadd.f32 %v342, %v486
    %v488 = vpop.f32.mrb[0].mxu0
    %489 = vmatprep.mubr.bf16.mxu0 0
    %490 = vmatmul.mubr.bf16.gmra.mrb[0].mxu0 %v195
    %v491 = vpop.f32.mrb[0].mxu0
    %v492 = vadd.f32 %v347, %v491
    %v493 = vpop.f32.mrb[0].mxu0
    %v494 = vpop.f32.mrb[0].mxu0
    %v495 = vadd.f32 %v350, %v494
    %v496 = vpop.f32.mrb[0].mxu0
    %497 = vmatprep.mubr.bf16.mxu0 0
    %498 = vmatmul.mubr.bf16.gmra.mrb[0].mxu0 %v196
    %v499 = vpop.f32.mrb[0].mxu0
    %v500 = vadd.f32 %v355, %v499
    %v501 = vpop.f32.mrb[0].mxu0
    %v502 = vpop.f32.mrb[0].mxu0
    %v503 = vadd.f32 %v358, %v502
    %v504 = vpop.f32.mrb[0].mxu0
    %505 = vmatprep.mubr.bf16.mxu0 0
    %506 = vmatmul.mubr.bf16.gmra.mrb[0].mxu0 %v197
    %v507 = vpop.f32.mrb[0].mxu0
    %v508 = vadd.f32 %v363, %v507
    %v509 = vpop.f32.mrb[0].mxu0
    %v510 = vpop.f32.mrb[0].mxu0
    %v511 = vadd.f32 %v366, %v510
    %v512 = vpop.f32.mrb[0].mxu0
    %513 = vmatprep.mubr.bf16.mxu0 0
    %514 = vmatmul.mubr.bf16.gmra.mrb[0].mxu0 %v198
    %v515 = vpop.f32.mrb[0].mxu0
    %v516 = vadd.f32 %v371, %v515
    %v517 = vpop.f32.mrb[0].mxu0
    %v518 = vpop.f32.mrb[0].mxu0
    %v519 = vadd.f32 %v374, %v518
    %v520 = vpop.f32.mrb[0].mxu0
    %521 = vmatprep.mubr.bf16.mxu0 0
    %522 = vmatmul.mubr.bf16.gmra.mrb[0].mxu0 %v199
    %v523 = vpop.f32.mrb[0].mxu0
    %v524 = vadd.f32 %v379, %v523
    %v525 = vpop.f32.mrb[0].mxu0
    %v526 = vpop.f32.mrb[0].mxu0
    %v527 = vadd.f32 %v382, %v526
    %v528 = vpop.f32.mrb[0].mxu0
    %529 = vdwg.mxu0
    %v530 = vld [vmem:[%s6] sm:$0x1]
    %v532 = vlaneseq
    %v533 = vshrl.u32 %v532, 7
    %v534 = vsub.s32 0, %v533
    %v535 = vrot.slane %v530, %v534
    %v537 = vadd.f32 %v468, %v535
    %v538 = vadd.f32 %v471, %v535
    %v539 = vadd.f32 %v476, %v535
    %v540 = vadd.f32 %v479, %v535
    %v541 = vadd.f32 %v484, %v535
    %v542 = vadd.f32 %v487, %v535
    %v543 = vadd.f32 %v492, %v535
    %v544 = vadd.f32 %v495, %v535
    %v545 = vadd.f32 %v500, %v535
    %v546 = vadd.f32 %v503, %v535
    %v547 = vadd.f32 %v508, %v535
    %v548 = vadd.f32 %v511, %v535
    %v549 = vadd.f32 %v516, %v535
    %v550 = vadd.f32 %v519, %v535
    %v551 = vadd.f32 %v524, %v535
    %v552 = vadd.f32 %v527, %v535
    %v553 = vld [vmem:[#allocation9] sm:$0xff]
    %v554 = vld [vmem:[#allocation9 + $0x8] sm:$0xff]
    %v555 = vld [vmem:[#allocation9 + $0x10] sm:$0xff]
    %v556 = vld [vmem:[#allocation9 + $0x18] sm:$0xff]
    %v557 = vld [vmem:[#allocation9 + $0x20] sm:$0xff]
    %v558 = vld [vmem:[#allocation9 + $0x28] sm:$0xff]
    %v559 = vld [vmem:[#allocation9 + $0x30] sm:$0xff]
    %v560 = vld [vmem:[#allocation9 + $0x38] sm:$0xff]
    %v561 = vld [vmem:[#allocation9 + $0x40] sm:$0xff]
    %v562 = vld [vmem:[#allocation9 + $0x48] sm:$0xff]
    %v563 = vld [vmem:[#allocation9 + $0x50] sm:$0xff]
    %v564 = vld [vmem:[#allocation9 + $0x58] sm:$0xff]
    %v565 = vld [vmem:[#allocation9 + $0x60] sm:$0xff]
    %v566 = vld [vmem:[#allocation9 + $0x68] sm:$0xff]
    %v567 = vld [vmem:[#allocation9 + $0x70] sm:$0xff]
    %v568 = vld [vmem:[#allocation9 + $0x78] sm:$0xff]
    %v569 = vmax.f32 %v537, 0.0
    %v570 = vmax.f32 %v538, 0.0
    %v571 = vmax.f32 %v539, 0.0
    %v572 = vmax.f32 %v540, 0.0
    %v573 = vmax.f32 %v541, 0.0
    %v574 = vmax.f32 %v542, 0.0
    %v575 = vmax.f32 %v543, 0.0
    %v576 = vmax.f32 %v544, 0.0
    %v577 = vmax.f32 %v545, 0.0
    %v578 = vmax.f32 %v546, 0.0
    %v579 = vmax.f32 %v547, 0.0
    %v580 = vmax.f32 %v548, 0.0
    %v581 = vmax.f32 %v549, 0.0
    %v582 = vmax.f32 %v550, 0.0
    %v583 = vmax.f32 %v551, 0.0
    %v584 = vmax.f32 %v552, 0.0
    %v585 = vadd.f32 %v553, %v569
    %v586 = vadd.f32 %v554, %v570
    %v587 = vadd.f32 %v555, %v571
    %v588 = vadd.f32 %v556, %v572
    %v589 = vadd.f32 %v557, %v573
    %v590 = vadd.f32 %v558, %v574
    %v591 = vadd.f32 %v559, %v575
    %v592 = vadd.f32 %v560, %v576
    %v593 = vadd.f32 %v561, %v577
    %v594 = vadd.f32 %v562, %v578
    %v595 = vadd.f32 %v563, %v579
    %v596 = vadd.f32 %v564, %v580
    %v597 = vadd.f32 %v565, %v581
    %v598 = vadd.f32 %v566, %v582
    %v599 = vadd.f32 %v567, %v583
    %v600 = vadd.f32 %v568, %v584
    %601 = vst [vmem:[#allocation14] sm:$0xff] %v585
    %602 = vst [vmem:[#allocation14 + $0x8] sm:$0xff] %v586
    %603 = vst [vmem:[#allocation14 + $0x10] sm:$0xff] %v587
    %604 = vst [vmem:[#allocation14 + $0x18] sm:$0xff] %v588
    %605 = vst [vmem:[#allocation14 + $0x20] sm:$0xff] %v589
    %606 = vst [vmem:[#allocation14 + $0x28] sm:$0xff] %v590
    %607 = vst [vmem:[#allocation14 + $0x30] sm:$0xff] %v591
    %608 = vst [vmem:[#allocation14 + $0x38] sm:$0xff] %v592
    %609 = vst [vmem:[#allocation14 + $0x40] sm:$0xff] %v593
    %610 = vst [vmem:[#allocation14 + $0x48] sm:$0xff] %v594
    %611 = vst [vmem:[#allocation14 + $0x50] sm:$0xff] %v595
    %612 = vst [vmem:[#allocation14 + $0x58] sm:$0xff] %v596
    %613 = vst [vmem:[#allocation14 + $0x60] sm:$0xff] %v597
    %614 = vst [vmem:[#allocation14 + $0x68] sm:$0xff] %v598
    %615 = vst [vmem:[#allocation14 + $0x70] sm:$0xff] %v599
    %616 = vst [vmem:[#allocation14 + $0x78] sm:$0xff] %v600
    // Predicated region
    $region52: #{tpu_custom_call.1} parent=1 // pred_check
      _
    $region53: #{tpu_custom_call.1} parent=1 // pred_check_branch
      %618 = sbr.rel (0) target = $region55
    $region54: #{tpu_custom_call.1} parent=1 // pred_region
      %s620 = ssub.s32 2048, 2048
      %621 = vsyncadd [#allocation8], %s620
      %s622 = sshll.u32 [#allocation14], 4
      %s623 = int_to_ptr.vmem [resolvable:$true] %s622
      %628 = dma.vmem_to_hbm [thread:$0]  %s623, 2048, %s7, [#allocation8], 128, 128, 8
    $region55: #{tpu_custom_call.1} parent=1 // pred_fallthru
      _
    // Predicated region
    $region56: #{tpu_custom_call.1} parent=1 // pred_check
      _
    $region57: #{tpu_custom_call.1} parent=1 // pred_check_branch
      %630 = sbr.rel (0) target = $region59
    $region58: #{tpu_custom_call.1} parent=1 // pred_region
      %631 = dma.done [#allocation8], 2048
    $region59: #{tpu_custom_call.1} parent=1 // pred_fallthru
      _
    %632 = vsyncpa [#allocation7], 1
    %633 = vsyncpa [#allocation10], 1
    %634 = vsyncpa [#allocation13], 1
    %635 = vsyncpa [#allocation8], 1

</llo_original>
